<compile_context>
chip_gen: v6e
topology: v6e:2x2x1
jax: 0.10.0
libtpu: 0.0.40
codegen_flags: <defaults>
</compile_context>

<pallas_src>
import numpy as np
import jax
import jax.numpy as jnp
from jax.experimental import pallas as pl
from jax.experimental.pallas import tpu as pltpu


def _round_up(x, m):
    return (x + m - 1) // m * m


# ---------------------------------------------------------------------------
# Pallas kernel 1: tiled matmul + fused bias (used by every conv / linear)
# ---------------------------------------------------------------------------
def _mm_bias_kernel(a_ref, b_ref, bias_ref, o_ref, acc_ref):
    @pl.when(pl.program_id(2) == 0)
    def _():
        acc_ref[...] = jnp.zeros_like(acc_ref)

    acc_ref[...] += jnp.dot(a_ref[...], b_ref[...],
                            preferred_element_type=jnp.float32)

    @pl.when(pl.program_id(2) == pl.num_programs(2) - 1)
    def _():
        o_ref[...] = (acc_ref[...] + bias_ref[0:1, :]).astype(o_ref.dtype)


def pallas_matmul(a, w, bias=None):
    """a:(M,K) @ w:(K,N) + bias:(N,) with f32 accumulation on the MXU."""
    M, K = a.shape
    K2, N = w.shape
    assert K == K2
    if bias is None:
        bias = jnp.zeros((N,), a.dtype)

    tm = 512 if M > 512 else _round_up(M, 8)
    tk = 512 if K > 512 else _round_up(K, 8)
    tn = 128 if N > 128 else N
    Mp, Kp, Np = _round_up(M, tm), _round_up(K, tk), _round_up(N, tn)

    a_p = a if (Mp == M and Kp == K) else jnp.pad(a, ((0, Mp - M), (0, Kp - K)))
    w_p = w if (Kp == K and Np == N) else jnp.pad(w, ((0, Kp - K), (0, Np - N)))
    b_p = bias if Np == N else jnp.pad(bias, (0, Np - N))
    b_p = jnp.broadcast_to(b_p.reshape(1, Np), (8, Np))   # sublane-safe bias tile

    grid = (Mp // tm, Np // tn, Kp // tk)
    out = pl.pallas_call(
        _mm_bias_kernel,
        out_shape=jax.ShapeDtypeStruct((Mp, Np), a.dtype),
        grid_spec=pltpu.PrefetchScalarGridSpec(
            num_scalar_prefetch=0,
            grid=grid,
            in_specs=[
                pl.BlockSpec((tm, tk), lambda i, j, k: (i, k)),
                pl.BlockSpec((tk, tn), lambda i, j, k: (k, j)),
                pl.BlockSpec((8, tn), lambda i, j, k: (0, j)),
            ],
            out_specs=pl.BlockSpec((tm, tn), lambda i, j, k: (i, j)),
            scratch_shapes=[pltpu.VMEM((tm, tn), jnp.float32)],
        ),
        compiler_params=pltpu.CompilerParams(
            dimension_semantics=("parallel", "parallel", "arbitrary")),
        cost_estimate=pl.CostEstimate(
            flops=2 * Mp * Np * Kp,
            transcendentals=0,
            bytes_accessed=4 * (Mp * Kp + Kp * Np + Mp * Np)),
    )(a_p, w_p, b_p)

    if (Mp, Np) != (M, N):
        out = out[:M, :N]
    return out


# ---------------------------------------------------------------------------
# Pallas kernel 2: per-row scale/shift + activation
#   (training-mode BatchNorm3d apply fused with LeakyReLU / ReLU / 2*sigmoid)
# ---------------------------------------------------------------------------
def _make_bn_act_kernel(act):
    def kernel(x_ref, s_ref, t_ref, o_ref):
        y = x_ref[...] * s_ref[...] + t_ref[...]
        if act == "leaky_relu":
            y = jnp.where(y >= 0.0, y, 0.01 * y)
        elif act == "relu":
            y = jnp.maximum(y, 0.0)
        elif act == "sigmoid2":
            y = 2.0 / (1.0 + jnp.exp(-y))        # Act_op: 2 * sigmoid(x)
        elif act != "none":
            raise ValueError(act)
        o_ref[...] = y.astype(o_ref.dtype)
    return kernel


def batchnorm_act(x, eps, act):
    """Training-mode BatchNorm3d (gamma=1, beta=0, batch statistics) + activation."""
    N, C = x.shape[0], x.shape[1]
    P = int(np.prod(x.shape[2:]))

    mean = jnp.mean(x, axis=(0, 2, 3, 4))            # (C,) batch stats (glue)
    var = jnp.var(x, axis=(0, 2, 3, 4))              # biased, like PyTorch
    scale_c = 1.0 / jnp.sqrt(var + eps)
    shift_c = -mean * scale_c

    R = N * C
    Rp = _round_up(R, 8)
    x2 = x.reshape(R, P)
    scale = jnp.tile(scale_c, (N,)).reshape(R, 1)
    shift = jnp.tile(shift_c, (N,)).reshape(R, 1)

    # lane chunking: keep full rows when small, else 64K-lane chunks
    if P * 4 <= 1024 * 1024:
        pc, Pp = P, P
    else:
        pc = 65536
        Pp = _round_up(P, pc)

    if (Rp, Pp) != (R, P):
        x2 = jnp.pad(x2, ((0, Rp - R), (0, Pp - P)))
    if Rp != R:
        scale = jnp.pad(scale, ((0, Rp - R), (0, 0)))
        shift = jnp.pad(shift, ((0, Rp - R), (0, 0)))

    # rows per block: multiple of 8, divides Rp, block <= ~4 MiB
    cap = max(8, ((4 * 1024 * 1024) // (pc * 4)) // 8 * 8)
    if Rp <= cap:
        rb = Rp
    else:
        rb = 8
        d = cap
        while d >= 8:
            if Rp % d == 0:
                rb = d
                break
            d -= 8

    grid = (Rp // rb, Pp // pc)
    out = pl.pallas_call(
        _make_bn_act_kernel(act),
        out_shape=jax.ShapeDtypeStruct((Rp, Pp), x.dtype),
        grid_spec=pltpu.PrefetchScalarGridSpec(
            num_scalar_prefetch=0,
            grid=grid,
            in_specs=[
                pl.BlockSpec((rb, pc), lambda i, j: (i, j)),
                pl.BlockSpec((rb, 1), lambda i, j: (i, 0)),
                pl.BlockSpec((rb, 1), lambda i, j: (i, 0)),
            ],
            out_specs=pl.BlockSpec((rb, pc), lambda i, j: (i, j)),
        ),
        compiler_params=pltpu.CompilerParams(
            dimension_semantics=("parallel", "parallel")),
    )(x2, scale, shift)

    if (Rp, Pp) != (R, P):
        out = out[:R, :P]
    return out.reshape(x.shape)


# ---------------------------------------------------------------------------
# Conv3d / ConvTranspose3d via (separable im2col / col2im) + the Pallas GEMM
# ---------------------------------------------------------------------------
def _unfold(x, axis, k, stride):
    """Stack k strided slices -> inserts a new axis of size k at `axis`."""
    L = x.shape[axis]
    L_out = (L - k) // stride + 1
    slices = [
        jax.lax.slice_in_dim(x, j, j + (L_out - 1) * stride + 1,
                             stride=stride, axis=axis)
        for j in range(k)
    ]
    return jnp.stack(slices, axis=axis)


def conv3d(x, w, b, stride):
    """PyTorch-style Conv3d (padding=0, dilation=1)."""
    N, Cin, D, H, W = x.shape
    Cout, _, kd, kh, kw = w.shape
    p = _unfold(x, 2, kd, stride)              # (N, Cin, kd, Do, H,  W)
    p = _unfold(p, 4, kh, stride)              # (N, Cin, kd, Do, kh, Ho, W)
    p = _unfold(p, 6, kw, stride)              # (N, Cin, kd, Do, kh, Ho, kw, Wo)
    Do, Ho, Wo = p.shape[3], p.shape[5], p.shape[7]
    p = p.transpose(0, 3, 5, 7, 1, 2, 4, 6)    # (N, Do, Ho, Wo, Cin, kd, kh, kw)
    a = p.reshape(N * Do * Ho * Wo, Cin * kd * kh * kw)
    wm = w.reshape(Cout, Cin * kd * kh * kw).T
    y = pallas_matmul(a, wm, b)                # (N*Do*Ho*Wo, Cout)
    return y.reshape(N, Do, Ho, Wo, Cout).transpose(0, 4, 1, 2, 3)


def conv_transpose3d(x, w, b, stride):
    """PyTorch-style ConvTranspose3d (padding=0, output_padding=0)."""
    N, Cin, D, H, W = x.shape
    _, Cout, kd, kh, kw = w.shape
    Do = (D - 1) * stride + kd
    Ho = (H - 1) * stride + kh
    Wo = (W - 1) * stride + kw

    a = x.transpose(0, 2, 3, 4, 1).reshape(N * D * H * W, Cin)
    wm = w.reshape(Cin, Cout * kd * kh * kw)
    cols = pallas_matmul(a, wm, None)                 # (N*D*H*W, Cout*kd*kh*kw)
    cols = cols.reshape(N, D, H, W, Cout, kd, kh, kw)
    cols = cols.transpose(0, 4, 5, 6, 7, 1, 2, 3)     # (N, Cout, kd, kh, kw, D, H, W)

    # separable col2im scatter-add: W axis, then H, then D
    t = jnp.zeros((N, Cout, kd, kh, D, H, Wo), x.dtype)
    for j in range(kw):
        t = t.at[..., j:j + (W - 1) * stride + 1:stride].add(cols[:, :, :, :, j])
    t2 = jnp.zeros((N, Cout, kd, D, Ho, Wo), x.dtype)
    for j in range(kh):
        t2 = t2.at[:, :, :, :, j:j + (H - 1) * stride + 1:stride, :].add(t[:, :, :, j])
    out = jnp.zeros((N, Cout, Do, Ho, Wo), x.dtype)
    for j in range(kd):
        out = out.at[:, :, j:j + (D - 1) * stride + 1:stride, :, :].add(t2[:, :, j])

    # bias is mathematically cancelled by the following training-mode BN,
    # but keep it for structural faithfulness.
    return out + b.reshape(1, Cout, 1, 1, 1)


# ---------------------------------------------------------------------------
# CVAE forward pass
# ---------------------------------------------------------------------------
class CVAE:
    """JAX/Pallas forward-pass equivalent of the PyTorch CVAE (train-mode BN)."""

    ENC = [(1, 16, 6, 2), (16, 32, 5, 3), (32, 64, 5, 3), (64, 128, 4, 1)]
    DEC = [(128, 64, 4, 1), (64, 32, 5, 3), (32, 16, 5, 3), (16, 1, 6, 2)]

    def __init__(self, key, z_dim=300, h_dim=128, h_dim2=3000):
        def u(k, shape, fan_in):
            bound = 1.0 / np.sqrt(fan_in)
            return jax.random.uniform(k, shape, jnp.float32, -bound, bound)

        keys = iter(jax.random.split(key, 32))
        self.enc = []
        for (ci, co, ksz, s) in self.ENC:
            w = u(next(keys), (co, ci, ksz, ksz, ksz), ci * ksz ** 3)
            bb = u(next(keys), (co,), ci * ksz ** 3)
            self.enc.append((w, bb, s))
        self.dec = []
        for (ci, co, ksz, s) in self.DEC:
            w = u(next(keys), (ci, co, ksz, ksz, ksz), ci * ksz ** 3)
            bb = u(next(keys), (co,), ci * ksz ** 3)
            self.dec.append((w, bb, s))

        def lin(k1, k2, fin, fout):
            return (u(k1, (fin, fout), fin), u(k2, (fout,), fin))

        self.fc0 = lin(next(keys), next(keys), h_dim, h_dim2)
        self.fc1 = lin(next(keys), next(keys), h_dim2, z_dim)
        self.fc2 = lin(next(keys), next(keys), h_dim2, z_dim)
        self.fc3 = lin(next(keys), next(keys), z_dim, h_dim2)
        self.fc4 = lin(next(keys), next(keys), h_dim2, h_dim)

    def encode(self, x, rng):
        h = x
        for (w, b, s) in self.enc:
            h = conv3d(h, w, b, s)
            h = batchnorm_act(h, eps=1e-5, act="leaky_relu")
        h = h.reshape(h.shape[0], -1)                  # Flatten
        h = pallas_matmul(h, *self.fc0)                # fc0
        mu = pallas_matmul(h, *self.fc1)               # fc1
        logvar = pallas_matmul(h, *self.fc2)           # fc2
        std = jnp.exp(0.5 * logvar)                    # reparameterization
        eps = jax.random.normal(rng, mu.shape, mu.dtype)
        z = mu + std * eps
        return z, mu, logvar

    def decode(self, z):
        z = pallas_matmul(z, *self.fc3)                # fc3
        z = pallas_matmul(z, *self.fc4)                # fc4
        h = z.reshape(z.shape[0], 128, 1, 1, 1)        # UnFlatten
        dec_acts = ["relu", "relu", "relu", "sigmoid2"]   # last act = Act_op
        for (w, b, s), act in zip(self.dec, dec_acts):
            h = conv_transpose3d(h, w, b, s)
            h = batchnorm_act(h, eps=1e-3, act=act)    # BatchNorm3d(C, 0.001)
        return h

    def __call__(self, x, rng):
        z, mu, logvar = self.encode(x, rng)
        recon = self.decode(z)
        return recon, mu, logvar


if __name__ == "__main__":
    key = jax.random.PRNGKey(0)
    k_param, k_data, k_eps = jax.random.split(key, 3)

    # Smallest spatial size consistent with Flatten -> Linear(128, 3000):
    # 92 -> 44 -> 14 -> 4 -> 1 through the four encoder convs.
    N, C, S = 2, 1, 92
    x = jax.random.normal(k_data, (N, C, S, S, S), dtype=jnp.float32)

    model = CVAE(k_param)

    # quick numeric sanity checks of the two Pallas kernels against plain jnp
    a = jax.random.normal(jax.random.PRNGKey(1), (37, 300), jnp.float32)
    w = jax.random.normal(jax.random.PRNGKey(2), (300, 200), jnp.float32) * 0.05
    bb = jax.random.normal(jax.random.PRNGKey(3), (200,), jnp.float32)
    assert jnp.allclose(pallas_matmul(a, w, bb), a @ w + bb, atol=1e-3, rtol=1e-3)

    t = jax.random.normal(jax.random.PRNGKey(4), (2, 3, 4, 5, 6), jnp.float32)
    got = batchnorm_act(t, eps=1e-5, act="relu")
    m = t.mean(axis=(0, 2, 3, 4), keepdims=True)
    v = t.var(axis=(0, 2, 3, 4), keepdims=True)
    ref = jnp.maximum((t - m) / jnp.sqrt(v + 1e-5), 0.0)
    assert jnp.allclose(got, ref, atol=1e-4, rtol=1e-4)

    recon, mu, logvar = model(x, k_eps)
    recon, mu, logvar = jax.block_until_ready((recon, mu, logvar))

    assert recon.shape == (N, C, S, S, S), recon.shape
    assert mu.shape == (N, 300) and logvar.shape == (N, 300)
    assert bool(jnp.all(jnp.isfinite(recon)))
    assert bool(jnp.all(jnp.isfinite(mu))) and bool(jnp.all(jnp.isfinite(logvar)))
    assert bool(jnp.all((recon >= 0.0) & (recon <= 2.0)))   # 2*sigmoid range

    print("KERNEL_OK")
</pallas_src>

<mosaic_0001>
module attributes {stable_mosaic.version = 11 : i64} {
  func.func @_mm_bias_kernel(%arg0: i32, %arg1: i32, %arg2: i32, %arg3: memref<40x304xf32, #tpu.memory_space<vmem>>, %arg4: memref<304x128xf32, #tpu.memory_space<vmem>>, %arg5: memref<8x128xf32, #tpu.memory_space<vmem>>, %arg6: memref<40x128xf32, #tpu.memory_space<vmem>>, %arg7: memref<40x128xf32, #tpu.memory_space<vmem>>) attributes {dimension_semantics = [#tpu.dimension_semantics<parallel>, #tpu.dimension_semantics<parallel>, #tpu.dimension_semantics<arbitrary>], iteration_bounds = array<i64: 1, 2, 1>, scalar_prefetch = 0 : i64, scratch_operands = 1 : i64, tpu.core_type = #tpu.core_type<tc>, window_params = [{transform_indices = @transform_0, window_bounds = array<i64: 40, 304>}, {transform_indices = @transform_1, window_bounds = array<i64: 304, 128>}, {transform_indices = @transform_2, window_bounds = array<i64: 8, 128>}, {transform_indices = @transform_3, window_bounds = array<i64: 40, 128>}]} {
    %c0_i32 = arith.constant 0 : i32
    %0 = arith.cmpi eq, %arg2, %c0_i32 : i32
    %1 = arith.extui %0 : i1 to i32
    %c0_i32_0 = arith.constant 0 : i32
    %2 = arith.cmpi ne, %1, %c0_i32_0 : i32
    scf.if %2 {
      %cst_10 = arith.constant 0.000000e+00 : f32
      %12 = vector.broadcast %cst_10 : f32 to vector<40x128xf32>
      %c0_11 = arith.constant 0 : index
      %c0_12 = arith.constant 0 : index
      %13 = vector.load %arg7[%c0_11, %c0_12] : memref<40x128xf32, #tpu.memory_space<vmem>>, vector<40x128xf32>
      tpu.vector_store %arg7[%c0_11, %c0_12], %12 {strides = array<i32>} : memref<40x128xf32, #tpu.memory_space<vmem>>, vector<40x128xf32>,
    } else {
    }
    %c0 = arith.constant 0 : index
    %c0_1 = arith.constant 0 : index
    %3 = vector.load %arg7[%c0, %c0_1] : memref<40x128xf32, #tpu.memory_space<vmem>>, vector<40x128xf32>
    %c0_2 = arith.constant 0 : index
    %c0_3 = arith.constant 0 : index
    %4 = vector.load %arg3[%c0_2, %c0_3] : memref<40x304xf32, #tpu.memory_space<vmem>>, vector<40x304xf32>
    %c0_4 = arith.constant 0 : index
    %c0_5 = arith.constant 0 : index
    %5 = vector.load %arg4[%c0_4, %c0_5] : memref<304x128xf32, #tpu.memory_space<vmem>>, vector<304x128xf32>
    %cst = arith.constant dense<0.000000e+00> : vector<40x128xf32>
    %6 = tpu.matmul %4, %5, %cst {dimension_numbers = #tpu.dot_dimension_numbers<[1], [0], [0], [1], [0, 0, 1, 1], [], []>} : vector<40x304xf32>, vector<304x128xf32>, vector<40x128xf32> -> vector<40x128xf32>
    %7 = arith.addf %3, %6 : vector<40x128xf32>
    %c0_6 = arith.constant 0 : index
    %c0_7 = arith.constant 0 : index
    %8 = vector.load %arg7[%c0_6, %c0_7] : memref<40x128xf32, #tpu.memory_space<vmem>>, vector<40x128xf32>
    tpu.vector_store %arg7[%c0_6, %c0_7], %7 {strides = array<i32>} : memref<40x128xf32, #tpu.memory_space<vmem>>, vector<40x128xf32>,
    %c0_i32_8 = arith.constant 0 : i32
    %9 = arith.cmpi eq, %arg2, %c0_i32_8 : i32
    %10 = arith.extui %9 : i1 to i32
    %c0_i32_9 = arith.constant 0 : i32
    %11 = arith.cmpi ne, %10, %c0_i32_9 : i32
    scf.if %11 {
      %c0_10 = arith.constant 0 : index
      %c0_11 = arith.constant 0 : index
      %12 = vector.load %arg7[%c0_10, %c0_11] : memref<40x128xf32, #tpu.memory_space<vmem>>, vector<40x128xf32>
      %c0_12 = arith.constant 0 : index
      %c0_13 = arith.constant 0 : index
      %13 = vector.load %arg5[%c0_12, %c0_13] : memref<8x128xf32, #tpu.memory_space<vmem>>, vector<1x128xf32>
      %14 = vector.broadcast %13 : vector<1x128xf32> to vector<40x128xf32>
      %15 = arith.addf %12, %14 : vector<40x128xf32>
      %c0_14 = arith.constant 0 : index
      %c0_15 = arith.constant 0 : index
      %16 = vector.load %arg6[%c0_14, %c0_15] : memref<40x128xf32, #tpu.memory_space<vmem>>, vector<40x128xf32>
      tpu.vector_store %arg6[%c0_14, %c0_15], %15 {strides = array<i32>} : memref<40x128xf32, #tpu.memory_space<vmem>>, vector<40x128xf32>,
    } else {
    }
    return
  }
  func.func @transform_0(%arg0: i32, %arg1: i32, %arg2: i32) -> (i32, i32) {
    %c0_i32 = arith.constant 0 : i32
    return %arg0, %arg2 : i32, i32
  }
  func.func @transform_1(%arg0: i32, %arg1: i32, %arg2: i32) -> (i32, i32) {
    %c0_i32 = arith.constant 0 : i32
    return %arg2, %arg1 : i32, i32
  }
  func.func @transform_2(%arg0: i32, %arg1: i32, %arg2: i32) -> (i32, i32) {
    %c0_i32 = arith.constant 0 : i32
    %c0_i32_0 = arith.constant 0 : i32
    return %c0_i32, %arg1 : i32, i32
  }
  func.func @transform_3(%arg0: i32, %arg1: i32, %arg2: i32) -> (i32, i32) {
    %c0_i32 = arith.constant 0 : i32
    return %arg0, %arg1 : i32, i32
  }
}

</mosaic_0001>

<llo_original>
// kernel: tpu_custom_call.1
$region0: #{tpu_custom_call.1}
  #allocation0 [shape = 'u32[]', space=smem, size = 0x4, offset = 0x4, fixed_abs, tag = 'smem constant byte address 0x4 - core index']
  #allocation1 [shape = 'u32[144,128]{1,0:T(1,128)}', space=vmem, size = 0x12000, scoped, tag = 'internal scratch']
  #allocation2 [shape = 'f32[40,128]{1,0:T(8,128)}', space=vmem, size = 0x5000, scoped, tag = 'scratch operand']
  %s0 = inlined_call_operand.hbm [shape: f32[40,304], index: 0, kind: input, shape index: {}]
  %s1 = inlined_call_operand.hbm [shape: f32[304,256], index: 1, kind: input, shape index: {}]
  %s2 = inlined_call_operand.hbm [shape: f32[8,256], index: 2, kind: input, shape index: {}]
  %s3 = inlined_call_operand.hbm [shape: f32[40,256], index: 3, kind: output, shape index: {}]
  %s4 = sld [smem:[#allocation0]]
  $region65: #{tpu_custom_call.1} parent=0
    _
  %s6 = ssub.s32 1, %s4
  %s7 = scalar_select 0, %s6, %s4
  $region1: #{tpu_custom_call.1} parent=0
    #allocation3 [shape = 'u8[61440]{0}', space=vmem, size = 0xf000, scoped, tag = 'input window, operand 0, single buffered']
    #allocation4 [shape = 's32[2]{0}', space=sflag, size = 0x8, scoped, tag = 'scoped memory for tpu_custom_call.1']
    #allocation5 [shape = 's32[2]{0}', space=sflag, size = 0x8, scoped, tag = 'scoped memory for tpu_custom_call.1']
    #allocation6 [shape = 'u8[311296]{0}', space=vmem, size = 0x4c000, scoped, tag = 'input window, operand 1']
    #allocation7 [shape = 's32[2]{0}', space=sflag, size = 0x8, scoped, tag = 'scoped memory for tpu_custom_call.1']
    #allocation8 [shape = 'u8[8192]{0}', space=vmem, size = 0x2000, scoped, tag = 'input window, operand 2']
    #allocation9 [shape = 'u8[40960]{0}', space=vmem, size = 0xa000, scoped, tag = 'output window, operand 0']
    %8 = vsyncpa [#allocation4], 0
    %9 = vsyncpa [#allocation7], 0
    %s10 = scalar_lea.sflag [#allocation7], 1
    %11 = vsyncpa %s10, 0
    %12 = vsyncpa [#allocation5], 0
    %s13 = scalar_lea.sflag [#allocation5], 1
    %14 = vsyncpa %s13, 0
    loop: start=0, step=1, limit=4
    $region2: #{tpu_custom_call.1} parent=1 // loop_pre_header
      _
    $region3: #{tpu_custom_call.1} parent=1 // loop_header
      %s16 = sphi 0, %s20
      %p17 = scmp.ge.s32.totalorder %s16, 4
      %s23 = sphi 0, %s42
      %s24 = sphi 0, %s38
      %s25 = sphi 0, %s34
      %s26 = sphi 0, %s23
      %s27 = sphi 0, %s24
      %s28 = sphi 0, %s25
      %s29 = sphi 0, %s26
      %s30 = sphi 0, %s27
      %s31 = sphi 0, %s28
      %s47 = sphi 0, %s49
      %s50 = sphi 0, %s47
      %s51 = sphi 0, %s50
      %s67 = sphi 0, %s51
      %s75 = sphi 0, %s77
      %s78 = sphi 0, %s75
      %s79 = sphi 0, %s78
      %s95 = sphi 0, %s79
      %s101 = sphi 0, %s103
      %s104 = sphi 0, %s101
      %s105 = sphi 0, %s104
      %s121 = sphi 0, %s105
      %s129 = sphi 0, %s131
      %s132 = sphi 0, %s129
      %s133 = sphi 0, %s132
      %s149 = sphi 0, %s133
    $region4: #{tpu_custom_call.1} parent=1 // loop_header_branch
      %19 = sbr.rel (%p17) target = $region8
    $region5: #{tpu_custom_call.1} parent=1 // loop_body
      %s21 = ssub.s32 %s16, 1
      %s22 = ssub.s32 %s16, 2
      %s32 = sadd.s32 1, %s25
      %p33 = scmp.ge.s32.totalorder %s32, 1
      %s34 = scalar_select %p33, 0, %s32
      %s35 = sadd.s32 1, %s24
      %s36 = scalar_select %p33, %s35, %s24
      %p37 = scmp.ge.s32.totalorder %s36, 2
      %s38 = scalar_select %p37, 0, %s36
      %s39 = sadd.s32 1, %s23
      %s40 = scalar_select %p37, %s39, %s23
      %p41 = scmp.ge.s32.totalorder %s40, 1
      %s42 = scalar_select %p41, 0, %s40
      %s43 = ssub.s32 %s23, %s42
      %s44 = ssub.s32 %s25, %s34
      %s45 = sor.u32 %s43, %s44
      %p46 = scmp.eq.s32.totalorder %s45, 0
      %s48 = sadd.s32 %s47, 1
      %s49 = scalar_select %p46, %s47, %s48
      %p52 = pneg %p46
      %p53 = scmp.eq.s32.totalorder %s16, 1
      %p54 = por %p52, %p53
      %p55 = scmp.ne.s32.totalorder %s47, %s50
      %p56 = scmp.eq.s32.totalorder %s16, 0
      %p57 = por %p55, %p56
      %p58 = scmp.ne.s32.totalorder %s47, %s50
      %p59 = scmp.eq.s32.totalorder %s21, 1
      %p60 = por %p58, %p59
      %p61 = scmp.ne.s32.totalorder %s50, %s51
      %p62 = scmp.eq.s32.totalorder %s21, 0
      %p63 = por %p61, %p62
      %p64 = scmp.ne.s32.totalorder %s50, %s51
      %p65 = scmp.eq.s32.totalorder %s22, 1
      %p66 = por %p64, %p65
      %p68 = scmp.ne.s32.totalorder %s51, %s67
      %p69 = scmp.eq.s32.totalorder %s22, 0
      %p70 = por %p68, %p69
      %s71 = ssub.s32 %s25, %s34
      %s72 = ssub.s32 %s24, %s38
      %s73 = sor.u32 %s71, %s72
      %p74 = scmp.eq.s32.totalorder %s73, 0
      %s76 = sadd.s32 %s75, 1
      %s77 = scalar_select %p74, %s75, %s76
      %p80 = pneg %p74
      %p81 = scmp.eq.s32.totalorder %s16, 1
      %p82 = por %p80, %p81
      %p83 = scmp.ne.s32.totalorder %s75, %s78
      %p84 = scmp.eq.s32.totalorder %s16, 0
      %p85 = por %p83, %p84
      %p86 = scmp.ne.s32.totalorder %s75, %s78
      %p87 = scmp.eq.s32.totalorder %s21, 1
      %p88 = por %p86, %p87
      %p89 = scmp.ne.s32.totalorder %s78, %s79
      %p90 = scmp.eq.s32.totalorder %s21, 0
      %p91 = por %p89, %p90
      %p92 = scmp.ne.s32.totalorder %s78, %s79
      %p93 = scmp.eq.s32.totalorder %s22, 1
      %p94 = por %p92, %p93
      %p96 = scmp.ne.s32.totalorder %s79, %s95
      %p97 = scmp.eq.s32.totalorder %s22, 0
      %p98 = por %p96, %p97
      %s99 = ssub.s32 %s24, %s38
      %p100 = scmp.eq.s32.totalorder %s99, 0
      %s102 = sadd.s32 %s101, 1
      %s103 = scalar_select %p100, %s101, %s102
      %p106 = pneg %p100
      %p107 = scmp.eq.s32.totalorder %s16, 1
      %p108 = por %p106, %p107
      %p109 = scmp.ne.s32.totalorder %s101, %s104
      %p110 = scmp.eq.s32.totalorder %s16, 0
      %p111 = por %p109, %p110
      %p112 = scmp.ne.s32.totalorder %s101, %s104
      %p113 = scmp.eq.s32.totalorder %s21, 1
      %p114 = por %p112, %p113
      %p115 = scmp.ne.s32.totalorder %s104, %s105
      %p116 = scmp.eq.s32.totalorder %s21, 0
      %p117 = por %p115, %p116
      %p118 = scmp.ne.s32.totalorder %s104, %s105
      %p119 = scmp.eq.s32.totalorder %s22, 1
      %p120 = por %p118, %p119
      %p122 = scmp.ne.s32.totalorder %s105, %s121
      %p123 = scmp.eq.s32.totalorder %s22, 0
      %p124 = por %p122, %p123
      %s125 = ssub.s32 %s23, %s42
      %s126 = ssub.s32 %s24, %s38
      %s127 = sor.u32 %s125, %s126
      %p128 = scmp.eq.s32.totalorder %s127, 0
      %s130 = sadd.s32 %s129, 1
      %s131 = scalar_select %p128, %s129, %s130
      %p134 = pneg %p128
      %p135 = scmp.eq.s32.totalorder %s16, 1
      %p136 = por %p134, %p135
      %p137 = scmp.ne.s32.totalorder %s129, %s132
      %p138 = scmp.eq.s32.totalorder %s16, 0
      %p139 = por %p137, %p138
      %p140 = scmp.ne.s32.totalorder %s129, %s132
      %p141 = scmp.eq.s32.totalorder %s21, 1
      %p142 = por %p140, %p141
      %p143 = scmp.ne.s32.totalorder %s132, %s133
      %p144 = scmp.eq.s32.totalorder %s21, 0
      %p145 = por %p143, %p144
      %p146 = scmp.ne.s32.totalorder %s132, %s133
      %p147 = scmp.eq.s32.totalorder %s22, 1
      %p148 = por %p146, %p147
      %p150 = scmp.ne.s32.totalorder %s133, %s149
      %p151 = scmp.eq.s32.totalorder %s22, 0
      %p152 = por %p150, %p151
      %p153 = scmp.le.s32.totalorder 1, %s16
      %p154 = scmp.lt.s32.totalorder %s16, 3
      %p155 = pnand %p153, %p154
      %p156 = pneg %p155
      // Predicated region
      $region9: #{tpu_custom_call.1} parent=5 // pred_check
        _
      $region10: #{tpu_custom_call.1} parent=5 // pred_check_branch
        %158 = sbr.rel (%p155) target = $region12
      $region11: #{tpu_custom_call.1} parent=5 // pred_region
        %s159 = ssub.s32 %s16, 1
        // Predicated region
        $region13: #{tpu_custom_call.1} parent=11 // pred_check
          %p160 = pneg %p63
        $region14: #{tpu_custom_call.1} parent=11 // pred_check_branch
          %162 = sbr.rel (%p160) target = $region16
        $region15: #{tpu_custom_call.1} parent=11 // pred_region
          %s163 = smul.u32 5, %s26
          %s164 = smul.u32 3, %s28
          %s166 = ssub.s32 1920, 1920
          %167 = vsyncadd [#allocation4], %s166
          %s168 = smul.addr %s163, 3
          %s169 = sadd.s32 %s164, %s168
          %s170 = smul.addr %s169, 128
          %s171 = scalar_lea.hbm %s0, %s170
          %s172 = sshll.u32 [#allocation3], 4
          %s173 = int_to_ptr.vmem [resolvable:$true] %s172
          %178 = dma.hbm_to_vmem [thread:$0]  %s171, 1920, %s173, [#allocation4], 384, 384, 24
        $region16: #{tpu_custom_call.1} parent=11 // pred_fallthru
          _
      $region12: #{tpu_custom_call.1} parent=5 // pred_fallthru
        _
      %p179 = scmp.lt.s32.totalorder %s16, 2
      // Predicated region
      $region17: #{tpu_custom_call.1} parent=5 // pred_check
        %p180 = pneg %p179
      $region18: #{tpu_custom_call.1} parent=5 // pred_check_branch
        %182 = sbr.rel (%p180) target = $region20
      $region19: #{tpu_custom_call.1} parent=5 // pred_region
        // Predicated region
        $region21: #{tpu_custom_call.1} parent=19 // pred_check
          %p183 = pneg %p85
        $region22: #{tpu_custom_call.1} parent=19 // pred_check_branch
          %185 = sbr.rel (%p183) target = $region24
        $region23: #{tpu_custom_call.1} parent=19 // pred_region
          %s186 = sand.u32 %s16, 1
          %s187 = scalar_lea.sflag [#allocation7], %s186
          %s188 = sand.u32 %s75, 1
          %s189 = smul.addr %s188, 304
          %s190 = scalar_lea.vmem [#allocation6], %s189
          %s191 = smul.u32 38, %s25
          %s193 = ssub.s32 4864, 4864
          %194 = vsyncadd %s187, %s193
          %s195 = smul.addr %s191, 2
          %s196 = sadd.s32 %s24, %s195
          %s197 = smul.addr %s196, 128
          %s198 = scalar_lea.hbm %s1, %s197
          %s199 = sshll.u32 %s190, 4
          %s200 = int_to_ptr.vmem [resolvable:$true] %s199
          %205 = dma.hbm_to_vmem [thread:$0]  %s198, 4864, %s200, %s187, 256, 128, 8
        $region24: #{tpu_custom_call.1} parent=19 // pred_fallthru
          _
        // Predicated region
        $region25: #{tpu_custom_call.1} parent=19 // pred_check
          %p206 = pneg %p111
        $region26: #{tpu_custom_call.1} parent=19 // pred_check_branch
          %208 = sbr.rel (%p206) target = $region28
        $region27: #{tpu_custom_call.1} parent=19 // pred_region
          %s209 = sand.u32 %s16, 1
          %s210 = scalar_lea.sflag [#allocation7], %s209
          %s211 = sand.u32 %s101, 1
          %s212 = smul.addr %s211, 8
          %s213 = scalar_lea.vmem [#allocation8], %s212
          %s215 = ssub.s32 128, 128
          %216 = vsyncadd %s210, %s215
          %s217 = smul.addr %s24, 128
          %s218 = scalar_lea.hbm %s2, %s217
          %s220 = sshll.u32 %s213, 4
          %s221 = int_to_ptr.vmem [resolvable:$true] %s220
          %223 = dma.hbm_to_vmem [thread:$0]  %s218, 128, %s221, %s210
        $region28: #{tpu_custom_call.1} parent=19 // pred_fallthru
          _
      $region20: #{tpu_custom_call.1} parent=5 // pred_fallthru
        _
      %p224 = scmp.le.s32.totalorder 1, %s16
      %p225 = scmp.lt.s32.totalorder %s16, 3
      %p226 = pnand %p224, %p225
      %p227 = pneg %p226
      // Predicated region
      $region29: #{tpu_custom_call.1} parent=5 // pred_check
        _
      $region30: #{tpu_custom_call.1} parent=5 // pred_check_branch
        %229 = sbr.rel (%p226) target = $region32
      $region31: #{tpu_custom_call.1} parent=5 // pred_region
        %s230 = ssub.s32 %s16, 1
        // Predicated region
        $region33: #{tpu_custom_call.1} parent=31 // pred_check
          %p231 = pneg %p63
        $region34: #{tpu_custom_call.1} parent=31 // pred_check_branch
          %233 = sbr.rel (%p231) target = $region36
        $region35: #{tpu_custom_call.1} parent=31 // pred_region
          %234 = dma.done [#allocation4], 1920
        $region36: #{tpu_custom_call.1} parent=31 // pred_fallthru
          _
        %s235 = sand.u32 %s21, 1
        %s236 = scalar_lea.sflag [#allocation7], %s235
        %s237 = sand.u32 %s78, 1
        %s238 = smul.addr %s237, 304
        %s239 = scalar_lea.vmem [#allocation6], %s238
        // Predicated region
        $region37: #{tpu_custom_call.1} parent=31 // pred_check
          %p240 = pneg %p91
        $region38: #{tpu_custom_call.1} parent=31 // pred_check_branch
          %242 = sbr.rel (%p240) target = $region40
        $region39: #{tpu_custom_call.1} parent=31 // pred_region
          %243 = dma.done %s236, 4864
        $region40: #{tpu_custom_call.1} parent=31 // pred_fallthru
          _
        %s244 = sand.u32 %s21, 1
        %s245 = scalar_lea.sflag [#allocation7], %s244
        %s246 = sand.u32 %s104, 1
        %s247 = smul.addr %s246, 8
        %s248 = scalar_lea.vmem [#allocation8], %s247
        // Predicated region
        $region41: #{tpu_custom_call.1} parent=31 // pred_check
          %p249 = pneg %p117
        $region42: #{tpu_custom_call.1} parent=31 // pred_check_branch
          %251 = sbr.rel (%p249) target = $region44
        $region43: #{tpu_custom_call.1} parent=31 // pred_region
          %252 = dma.done %s245, 128
        $region44: #{tpu_custom_call.1} parent=31 // pred_fallthru
          _
        %p253 = pneg %p63
        %p254 = pneg %p60
        %s255 = sand.u32 %s21, 1
        %s256 = scalar_lea.sflag [#allocation7], %s255
        %s257 = sand.u32 %s78, 1
        %s258 = smul.addr %s257, 304
        %s259 = scalar_lea.vmem [#allocation6], %s258
        %p260 = pneg %p91
        %p261 = pneg %p88
        %s262 = sand.u32 %s21, 1
        %s263 = scalar_lea.sflag [#allocation7], %s262
        %s264 = sand.u32 %s104, 1
        %s265 = smul.addr %s264, 8
        %s266 = scalar_lea.vmem [#allocation8], %s265
        %p267 = pneg %p117
        %p268 = pneg %p114
        %p269 = pneg %p145
        %p270 = pneg %p142
        %s271 = sand.u32 %s132, 1
        %s272 = scalar_lea.sflag [#allocation5], %s271
        %s273 = sand.u32 %s132, 1
        %s274 = smul.addr %s273, 40
        %s275 = scalar_lea.vmem [#allocation9], %s274
        %s276 = smul.u32 5, %s26
        %s277 = smul.u32 3, %s28
        %s278 = smul.u32 38, %s28
        %s279 = smul.u32 5, %s26
        %p280 = scmp.eq.s32.totalorder %s28, 0
        // Predicated region
        $region45: #{tpu_custom_call.1} parent=31 // pred_check
          %p281 = pneg %p280
        $region46: #{tpu_custom_call.1} parent=31 // pred_check_branch
          %283 = sbr.rel (%p281) target = $region48
        $region47: #{tpu_custom_call.1} parent=31 // pred_region
          %284 = vst [vmem:[#allocation2] sm:$0xff] 0.0
          %285 = vst [vmem:[#allocation2 + $0x8] sm:$0xff] 0.0
          %286 = vst [vmem:[#allocation2 + $0x10] sm:$0xff] 0.0
          %287 = vst [vmem:[#allocation2 + $0x18] sm:$0xff] 0.0
          %288 = vst [vmem:[#allocation2 + $0x20] sm:$0xff] 0.0
        $region48: #{tpu_custom_call.1} parent=31 // pred_fallthru
          _
        %v289 = vld [vmem:[#allocation2] sm:$0xff]
        %v290 = vld [vmem:[#allocation2 + $0x8] sm:$0xff]
        %v291 = vld [vmem:[#allocation2 + $0x10] sm:$0xff]
        %v292 = vld [vmem:[#allocation2 + $0x18] sm:$0xff]
        %v293 = vld [vmem:[#allocation2 + $0x20] sm:$0xff]
        %v294 = vld [vmem:[#allocation3] sm:$0xff]
        %v295 = vld [vmem:[#allocation3 + $0x8] sm:$0xff]
        %v296 = vld [vmem:[#allocation3 + $0x10] sm:$0xff]
        %v297 = vld [vmem:[#allocation3 + $0x18] sm:$0xff]
        %v298 = vld [vmem:[#allocation3 + $0x20] sm:$0xff]
        %v299 = vld [vmem:[#allocation3 + $0x28] sm:$0xff]
        %v300 = vld [vmem:[#allocation3 + $0x30] sm:$0xff]
        %v301 = vld [vmem:[#allocation3 + $0x38] sm:$0xff]
        %v302 = vld [vmem:[#allocation3 + $0x40] sm:$0xff]
        %v303 = vld [vmem:[#allocation3 + $0x48] sm:$0xff]
        %v304 = vld [vmem:[#allocation3 + $0x50] sm:$0xff]
        %v305 = vld [vmem:[#allocation3 + $0x58] sm:$0xff]
        %v306 = vld [vmem:[#allocation3 + $0x60] sm:$0xff]
        %v307 = vld [vmem:[#allocation3 + $0x68] sm:$0xff]
        %v308 = vld [vmem:[#allocation3 + $0x70] sm:$0xff]
        %v309 = vld [vmem:[%s239] sm:$0xff]
        %v310 = vld [vmem:[%s239 + $0x8] sm:$0xff]
        %v311 = vld [vmem:[%s239 + $0x10] sm:$0xff]
        %v312 = vld [vmem:[%s239 + $0x18] sm:$0xff]
        %v313 = vld [vmem:[%s239 + $0x20] sm:$0xff]
        %v314 = vld [vmem:[%s239 + $0x28] sm:$0xff]
        %v315 = vld [vmem:[%s239 + $0x30] sm:$0xff]
        %v316 = vld [vmem:[%s239 + $0x38] sm:$0xff]
        %v317 = vld [vmem:[%s239 + $0x40] sm:$0xff]
        %v318 = vld [vmem:[%s239 + $0x48] sm:$0xff]
        %v319 = vld [vmem:[%s239 + $0x50] sm:$0xff]
        %v320 = vld [vmem:[%s239 + $0x58] sm:$0xff]
        %v321 = vld [vmem:[%s239 + $0x60] sm:$0xff]
        %v322 = vld [vmem:[%s239 + $0x68] sm:$0xff]
        %v323 = vld [vmem:[%s239 + $0x70] sm:$0xff]
        %v324 = vld [vmem:[%s239 + $0x78] sm:$0xff]
        %v325 = vld [vmem:[%s239 + $0x80] sm:$0xff]
        %v326 = vld [vmem:[%s239 + $0x88] sm:$0xff]
        %v327 = vld [vmem:[%s239 + $0x90] sm:$0xff]
        %v328 = vld [vmem:[%s239 + $0x98] sm:$0xff]
        %v329 = vld [vmem:[%s239 + $0xa0] sm:$0xff]
        %v330 = vld [vmem:[%s239 + $0xa8] sm:$0xff]
        %v331 = vld [vmem:[%s239 + $0xb0] sm:$0xff]
        %v332 = vld [vmem:[%s239 + $0xb8] sm:$0xff]
        %v333 = vld [vmem:[%s239 + $0xc0] sm:$0xff]
        %v334 = vld [vmem:[%s239 + $0xc8] sm:$0xff]
        %v335 = vld [vmem:[%s239 + $0xd0] sm:$0xff]
        %v336 = vld [vmem:[%s239 + $0xd8] sm:$0xff]
        %v337 = vld [vmem:[%s239 + $0xe0] sm:$0xff]
        %v338 = vld [vmem:[%s239 + $0xe8] sm:$0xff]
        %v339 = vld [vmem:[%s239 + $0xf0] sm:$0xff]
        %v340 = vld [vmem:[%s239 + $0xf8] sm:$0xff]
        %v341 = vld [vmem:[%s239 + $0x100] sm:$0xff]
        %v342 = vld [vmem:[%s239 + $0x108] sm:$0xff]
        %v343 = vld [vmem:[%s239 + $0x110] sm:$0xff]
        %v344 = vld [vmem:[%s239 + $0x118] sm:$0xff]
        %v345 = vld [vmem:[%s239 + $0x120] sm:$0xff]
        %v346 = vld [vmem:[%s239 + $0x128] sm:$0xff]
        %vm347 = vcmask 392192
        %v349 = vsel %vm347, %v296, 0
        %v352 = vsel %vm347, %v299, 0
        %v355 = vsel %vm347, %v302, 0
        %v358 = vsel %vm347, %v305, 0
        %v361 = vsel %vm347, %v308, 0
        %363 = vmatprep.subr.mxu0 0.0
        %364 = vmatpush1.msra.mxu0 %v324
        %365 = vmatprep.subr.mxu0 0.0
        %366 = vmatpush1.msra.mxu0 %v323
        %367 = vmatprep.subr.mxu0 0.0
        %368 = vmatpush1.msra.mxu0 %v322
        %369 = vmatprep.subr.mxu0 0.0
        %370 = vmatpush1.msra.mxu0 %v321
        %371 = vmatprep.subr.mxu0 0.0
        %372 = vmatpush1.msra.mxu0 %v320
        %373 = vmatprep.subr.mxu0 0.0
        %374 = vmatpush1.msra.mxu0 %v319
        %375 = vmatprep.subr.mxu0 0.0
        %376 = vmatpush1.msra.mxu0 %v318
        %377 = vmatprep.subr.mxu0 0.0
        %378 = vmatpush1.msra.mxu0 %v317
        %379 = vmatprep.subr.mxu0 0.0
        %380 = vmatpush1.msra.mxu0 %v316
        %381 = vmatprep.subr.mxu0 0.0
        %382 = vmatpush1.msra.mxu0 %v315
        %383 = vmatprep.subr.mxu0 0.0
        %384 = vmatpush1.msra.mxu0 %v314
        %385 = vmatprep.subr.mxu0 0.0
        %386 = vmatpush1.msra.mxu0 %v313
        %387 = vmatprep.subr.mxu0 0.0
        %388 = vmatpush1.msra.mxu0 %v312
        %389 = vmatprep.subr.mxu0 0.0
        %390 = vmatpush1.msra.mxu0 %v311
        %391 = vmatprep.subr.mxu0 0.0
        %392 = vmatpush1.msra.mxu0 %v310
        %393 = vmatprep.subr.mxu0 0.0
        %394 = vmatpush1.msra.mxu0 %v309
        %395 = vmatprep.subr.mxu0 0.0
        %396 = vmatpush2.msra.mxu0 %v340
        %397 = vmatprep.subr.mxu0 0.0
        %398 = vmatpush2.msra.mxu0 %v339
        %399 = vmatprep.subr.mxu0 0.0
        %400 = vmatpush2.msra.mxu0 %v338
        %401 = vmatprep.subr.mxu0 0.0
        %402 = vmatpush2.msra.mxu0 %v337
        %403 = vmatprep.subr.mxu0 0.0
        %404 = vmatpush2.msra.mxu0 %v336
        %405 = vmatprep.subr.mxu0 0.0
        %406 = vmatpush2.msra.mxu0 %v335
        %407 = vmatprep.subr.mxu0 0.0
        %408 = vmatpush2.msra.mxu0 %v334
        %409 = vmatprep.subr.mxu0 0.0
        %410 = vmatpush2.msra.mxu0 %v333
        %411 = vmatprep.subr.mxu0 0.0
        %412 = vmatpush2.msra.mxu0 %v332
        %413 = vmatprep.subr.mxu0 0.0
        %414 = vmatpush2.msra.mxu0 %v331
        %415 = vmatprep.subr.mxu0 0.0
        %416 = vmatpush2.msra.mxu0 %v330
        %417 = vmatprep.subr.mxu0 0.0
        %418 = vmatpush2.msra.mxu0 %v329
        %419 = vmatprep.subr.mxu0 0.0
        %420 = vmatpush2.msra.mxu0 %v328
        %421 = vmatprep.subr.mxu0 0.0
        %422 = vmatpush2.msra.mxu0 %v327
        %423 = vmatprep.subr.mxu0 0.0
        %424 = vmatpush2.msra.mxu0 %v326
        %425 = vmatprep.subr.mxu0 0.0
        %426 = vmatpush2.msra.mxu0 %v325
        %427 = vmatprep.mubr.f32.mxu0 %v295
        %428 = vmatmul.mubr.f32.gmra.mxu0 %v294
        %v429 = vpop.f32.mrf.mxu0
        %v430 = vadd.f32 0.0, %v429
        %v431 = vpop.f32.mrf.mxu0
        %432 = vmatprep.mubr.f32.mxu0 %v298
        %433 = vmatmul.mubr.f32.gmra.mxu0 %v297
        %v434 = vpop.f32.mrf.mxu0
        %v435 = vadd.f32 0.0, %v434
        %v436 = vpop.f32.mrf.mxu0
        %437 = vmatprep.mubr.f32.mxu0 %v301
        %438 = vmatmul.mubr.f32.gmra.mxu0 %v300
        %v439 = vpop.f32.mrf.mxu0
        %v440 = vadd.f32 0.0, %v439
        %v441 = vpop.f32.mrf.mxu0
        %442 = vmatprep.mubr.f32.mxu0 %v304
        %443 = vmatmul.mubr.f32.gmra.mxu0 %v303
        %v444 = vpop.f32.mrf.mxu0
        %v445 = vadd.f32 0.0, %v444
        %v446 = vpop.f32.mrf.mxu0
        %447 = vmatprep.mubr.f32.mxu0 %v307
        %448 = vmatmul.mubr.f32.gmra.mxu0 %v306
        %v449 = vpop.f32.mrf.mxu0
        %v450 = vadd.f32 0.0, %v449
        %v451 = vpop.f32.mrf.mxu0
        %452 = vdwg.mxu0
        %453 = vmatprep.subr.mxu0 0.0
        %454 = vmatpush1.msra.mxu0 0.0
        %455 = vmatprep.subr.mxu0 0.0
        %456 = vmatpush1.msra.mxu0 0.0
        %457 = vmatprep.subr.mxu0 0.0
        %458 = vmatpush1.msra.mxu0 0.0
        %459 = vmatprep.subr.mxu0 0.0
        %460 = vmatpush1.msra.mxu0 0.0
        %461 = vmatprep.subr.mxu0 0.0
        %462 = vmatpush1.msra.mxu0 0.0
        %463 = vmatprep.subr.mxu0 0.0
        %464 = vmatpush1.msra.mxu0 0.0
        %465 = vmatprep.subr.mxu0 0.0
        %466 = vmatpush1.msra.mxu0 0.0
        %467 = vmatprep.subr.mxu0 0.0
        %468 = vmatpush1.msra.mxu0 0.0
        %469 = vmatprep.subr.mxu0 0.0
        %470 = vmatpush1.msra.mxu0 0.0
        %471 = vmatprep.subr.mxu0 0.0
        %472 = vmatpush1.msra.mxu0 0.0
        %473 = vmatprep.subr.mxu0 0.0
        %474 = vmatpush1.msra.mxu0 %v346
        %475 = vmatprep.subr.mxu0 0.0
        %476 = vmatpush1.msra.mxu0 %v345
        %477 = vmatprep.subr.mxu0 0.0
        %478 = vmatpush1.msra.mxu0 %v344
        %479 = vmatprep.subr.mxu0 0.0
        %480 = vmatpush1.msra.mxu0 %v343
        %481 = vmatprep.subr.mxu0 0.0
        %482 = vmatpush1.msra.mxu0 %v342
        %483 = vmatprep.subr.mxu0 0.0
        %484 = vmatpush1.msra.mxu0 %v341
        %485 = vmatprep.subr.mxu0 0.0
        %486 = vmatpush2.msra.mxu0 0.0
        %487 = vmatprep.subr.mxu0 0.0
        %488 = vmatpush2.msra.mxu0 0.0
        %489 = vmatprep.subr.mxu0 0.0
        %490 = vmatpush2.msra.mxu0 0.0
        %491 = vmatprep.subr.mxu0 0.0
        %492 = vmatpush2.msra.mxu0 0.0
        %493 = vmatprep.subr.mxu0 0.0
        %494 = vmatpush2.msra.mxu0 0.0
        %495 = vmatprep.subr.mxu0 0.0
        %496 = vmatpush2.msra.mxu0 0.0
        %497 = vmatprep.subr.mxu0 0.0
        %498 = vmatpush2.msra.mxu0 0.0
        %499 = vmatprep.subr.mxu0 0.0
        %500 = vmatpush2.msra.mxu0 0.0
        %501 = vmatprep.subr.mxu0 0.0
        %502 = vmatpush2.msra.mxu0 0.0
        %503 = vmatprep.subr.mxu0 0.0
        %504 = vmatpush2.msra.mxu0 0.0
        %505 = vmatprep.subr.mxu0 0.0
        %506 = vmatpush2.msra.mxu0 0.0
        %507 = vmatprep.subr.mxu0 0.0
        %508 = vmatpush2.msra.mxu0 0.0
        %509 = vmatprep.subr.mxu0 0.0
        %510 = vmatpush2.msra.mxu0 0.0
        %511 = vmatprep.subr.mxu0 0.0
        %512 = vmatpush2.msra.mxu0 0.0
        %513 = vmatprep.subr.mxu0 0.0
        %514 = vmatpush2.msra.mxu0 0.0
        %515 = vmatprep.subr.mxu0 0.0
        %516 = vmatpush2.msra.mxu0 0.0
        %517 = vmatprep.mubr.f32.mxu0 0.0
        %518 = vmatmul.mubr.f32.gmra.mxu0 %v349
        %v519 = vpop.f32.mrf.mxu0
        %v520 = vadd.f32 %v430, %v519
        %v521 = vpop.f32.mrf.mxu0
        %522 = vmatprep.mubr.f32.mxu0 0.0
        %523 = vmatmul.mubr.f32.gmra.mxu0 %v352
        %v524 = vpop.f32.mrf.mxu0
        %v525 = vadd.f32 %v435, %v524
        %v526 = vpop.f32.mrf.mxu0
        %527 = vmatprep.mubr.f32.mxu0 0.0
        %528 = vmatmul.mubr.f32.gmra.mxu0 %v355
        %v529 = vpop.f32.mrf.mxu0
        %v530 = vadd.f32 %v440, %v529
        %v531 = vpop.f32.mrf.mxu0
        %532 = vmatprep.mubr.f32.mxu0 0.0
        %533 = vmatmul.mubr.f32.gmra.mxu0 %v358
        %v534 = vpop.f32.mrf.mxu0
        %v535 = vadd.f32 %v445, %v534
        %v536 = vpop.f32.mrf.mxu0
        %537 = vmatprep.mubr.f32.mxu0 0.0
        %538 = vmatmul.mubr.f32.gmra.mxu0 %v361
        %v539 = vpop.f32.mrf.mxu0
        %v540 = vadd.f32 %v450, %v539
        %v541 = vpop.f32.mrf.mxu0
        %542 = vdwg.mxu0
        %v543 = vadd.f32 %v289, %v520
        %v544 = vadd.f32 %v290, %v525
        %v545 = vadd.f32 %v291, %v530
        %v546 = vadd.f32 %v292, %v535
        %v547 = vadd.f32 %v293, %v540
        %548 = vst [vmem:[#allocation2] sm:$0xff] %v543
        %549 = vst [vmem:[#allocation2 + $0x8] sm:$0xff] %v544
        %550 = vst [vmem:[#allocation2 + $0x10] sm:$0xff] %v545
        %551 = vst [vmem:[#allocation2 + $0x18] sm:$0xff] %v546
        %552 = vst [vmem:[#allocation2 + $0x20] sm:$0xff] %v547
        // Predicated region
        $region49: #{tpu_custom_call.1} parent=31 // pred_check
          %p553 = pneg %p280
        $region50: #{tpu_custom_call.1} parent=31 // pred_check_branch
          %555 = sbr.rel (%p553) target = $region52
        $region51: #{tpu_custom_call.1} parent=31 // pred_region
          %v556 = vld [vmem:[#allocation2] sm:$0xff]
          %v557 = vld [vmem:[#allocation2 + $0x8] sm:$0xff]
          %v558 = vld [vmem:[#allocation2 + $0x10] sm:$0xff]
          %v559 = vld [vmem:[#allocation2 + $0x18] sm:$0xff]
          %v560 = vld [vmem:[#allocation2 + $0x20] sm:$0xff]
          %v561 = vld [vmem:[%s248] sm:$0x1]
          %v562 = vlaneseq
          %v563 = vshrl.u32 %v562, 7
          %v564 = vsub.s32 0, %v563
          %v565 = vrot.slane %v561, %v564
          %v566 = vadd.f32 %v556, %v565
          %v567 = vadd.f32 %v557, %v565
          %v568 = vadd.f32 %v558, %v565
          %v569 = vadd.f32 %v559, %v565
          %v570 = vadd.f32 %v560, %v565
          %571 = vst [vmem:[%s275] sm:$0xff] %v566
          %572 = vst [vmem:[%s275 + $0x8] sm:$0xff] %v567
          %573 = vst [vmem:[%s275 + $0x10] sm:$0xff] %v568
          %574 = vst [vmem:[%s275 + $0x18] sm:$0xff] %v569
          %575 = vst [vmem:[%s275 + $0x20] sm:$0xff] %v570
        $region52: #{tpu_custom_call.1} parent=31 // pred_fallthru
          _
        %s576 = sand.u32 %s132, 1
        %s577 = scalar_lea.sflag [#allocation5], %s576
        %s578 = sand.u32 %s132, 1
        %s579 = smul.addr %s578, 40
        %s580 = scalar_lea.vmem [#allocation9], %s579
        // Predicated region
        $region53: #{tpu_custom_call.1} parent=31 // pred_check
          %p581 = pneg %p142
        $region54: #{tpu_custom_call.1} parent=31 // pred_check_branch
          %583 = sbr.rel (%p581) target = $region56
        $region55: #{tpu_custom_call.1} parent=31 // pred_region
          %s584 = smul.u32 5, %s26
          %s586 = ssub.s32 640, 640
          %587 = vsyncadd %s577, %s586
          %s588 = smul.addr %s584, 2
          %s589 = sadd.s32 %s27, %s588
          %s590 = smul.addr %s589, 128
          %s591 = scalar_lea.hbm %s3, %s590
          %s592 = sshll.u32 %s580, 4
          %s593 = int_to_ptr.vmem [resolvable:$true] %s592
          %598 = dma.vmem_to_hbm [thread:$0]  %s593, 640, %s591, %s577, 128, 256, 8
        $region56: #{tpu_custom_call.1} parent=31 // pred_fallthru
          _
      $region32: #{tpu_custom_call.1} parent=5 // pred_fallthru
        _
      %p599 = scmp.le.s32.totalorder 2, %s16
      // Predicated region
      $region57: #{tpu_custom_call.1} parent=5 // pred_check
        %p600 = pneg %p599
      $region58: #{tpu_custom_call.1} parent=5 // pred_check_branch
        %602 = sbr.rel (%p600) target = $region60
      $region59: #{tpu_custom_call.1} parent=5 // pred_region
        %s603 = ssub.s32 %s16, 2
        // Predicated region
        $region61: #{tpu_custom_call.1} parent=59 // pred_check
          %p604 = pneg %p148
        $region62: #{tpu_custom_call.1} parent=59 // pred_check_branch
          %606 = sbr.rel (%p604) target = $region64
        $region63: #{tpu_custom_call.1} parent=59 // pred_region
          %s607 = sand.u32 %s133, 1
          %s608 = scalar_lea.sflag [#allocation5], %s607
          %s609 = sand.u32 %s133, 1
          %s610 = smul.addr %s609, 40
          %s611 = scalar_lea.vmem [#allocation9], %s610
          %612 = dma.done %s608, 640
        $region64: #{tpu_custom_call.1} parent=59 // pred_fallthru
          _
      $region60: #{tpu_custom_call.1} parent=5 // pred_fallthru
        _
    $region6: #{tpu_custom_call.1} parent=1 // loop_footer
      %s20 = sadd.s32 1, %s16
    $region7: #{tpu_custom_call.1} parent=1 // loop_footer_branch
      %15 = sbr.rel target = $region3
    $region8: #{tpu_custom_call.1} parent=1 // loop_exit
      _
    %613 = vsyncpa [#allocation4], 1
    %s614 = scalar_lea.sflag [#allocation4], 1
    %615 = vsyncpa %s614, 1
    %616 = vsyncpa [#allocation7], 1
    %s617 = scalar_lea.sflag [#allocation7], 1
    %618 = vsyncpa %s617, 1
    %619 = vsyncpa [#allocation5], 1
    %s620 = scalar_lea.sflag [#allocation5], 1
    %621 = vsyncpa %s620, 1

</llo_original>
